<compile_context>
chip_gen: v6e
topology: v6e:2x2x1
jax: 0.10.0
libtpu: 0.0.40
codegen_flags: <defaults>
</compile_context>

<pallas_src>
import numpy as np
import jax
import jax.numpy as jnp
from jax.experimental import pallas as pl
from jax.experimental.pallas import tpu as pltpu


# --------------------------------------------------------------------------- #
# Helpers
# --------------------------------------------------------------------------- #
def _shift_window(x, shift, length):
    """y[..., t] = x[..., t - shift] for t in [0, length); zero outside x's range."""
    L = x.shape[-1]
    left_pad = max(shift, 0)
    left_crop = max(-shift, 0)
    take = max(min(L - left_crop, length - left_pad), 0)
    xs = x[..., left_crop:left_crop + take]
    right_pad = length - left_pad - take
    pads = [(0, 0)] * (x.ndim - 1) + [(left_pad, right_pad)]
    return jnp.pad(xs, pads)


def _vmem_limit_bytes():
    cap = 64 * 1024 * 1024
    try:
        info = pltpu.get_tpu_info()
        cap = int(getattr(info, "vmem_capacity_bytes", cap))
    except Exception:
        pass
    return min(cap * 3 // 4, 112 * 1024 * 1024)


def _pick_tiling(N, C_in, C_out, s, kp_ext, M_out, budget):
    """Return (two_piece, bn, nb, tm, n_m)."""
    R = s * C_out
    halo = kp_ext - 1
    w_bytes = 2 * (R * kp_ext * C_in * 2) + 2 * (R * 4)          # dbl-buffered W + bias

    # Short-sequence mode: whole L resident per step, fold batch rows.
    Lq_single = M_out + halo
    per_row = 2 * (C_in * Lq_single * 2) + 2 * (R * M_out * 4)   # dbl-buffered x + out
    cap = min(N, 8)
    if N > 1:
        cap = min(cap, max(1, N // 2))   # keep >= 2 grid steps (feeds v7x's 2nd core)
    for cand in range(cap, 0, -1):
        if N % cand == 0 and w_bytes + cand * per_row <= budget:
            return False, cand, N // cand, M_out, 1

    # Long-sequence mode: halo-tile along L, one batch row per step.
    per_tm = 8 * C_in + 8 * R            # bytes / output column (2 x-specs bf16, out f32)
    avail = max(budget - w_bytes, per_tm * 128)
    tm = max(128, min((avail // per_tm) // 128 * 128, 2048))
    if halo > tm:
        tm = -(-halo // 128) * 128
    n_m = -(-M_out // tm)
    return True, 1, N, tm, n_m


def _make_kernel(*, bn, tm, kp_ext, two_piece):
    """Kernel body factory; all tile parameters are static Python ints."""

    def xcol(xwin):
        # (kp_ext*C_in, tm) im2col of the window: row jj*C_in + i = xwin[i, u + jj]
        if kp_ext == 1:
            return xwin[:, :tm]
        return jnp.concatenate([xwin[:, jj:jj + tm] for jj in range(kp_ext)], axis=0)

    if two_piece:
        def body(xa_ref, xb_ref, w_ref, b_ref, o_ref):
            # xa/xb: (bn, C_in, tm) bf16   (adjacent L blocks m and m+1 -> halo)
            # w:     (s*C_out, kp_ext*C_in) bf16 fused phase-major weights
            # b:     (s*C_out, 1) f32 ; o: (bn, s*C_out, tm) f32 phase-major output
            w = w_ref[...]
            bias = jnp.broadcast_to(b_ref[...], (w.shape[0], tm))   # hoisted once
            for b in range(bn):
                xwin = jnp.concatenate([xa_ref[b], xb_ref[b]], axis=1)
                acc = jnp.dot(w, xcol(xwin), preferred_element_type=jnp.float32)
                o_ref[b] = acc + bias
        return body

    def body(x_ref, w_ref, b_ref, o_ref):
        # x: (bn, C_in, L_q) bf16 (whole padded length resident)
        w = w_ref[...]
        bias = jnp.broadcast_to(b_ref[...], (w.shape[0], tm))       # hoisted once
        for b in range(bn):
            acc = jnp.dot(w, xcol(x_ref[b]), preferred_element_type=jnp.float32)
            o_ref[b] = acc + bias
    return body


# --------------------------------------------------------------------------- #
# Public entry point
# --------------------------------------------------------------------------- #
def equalized_conv_transpose1d(x, weight, bias=None, *, stride=1, padding=0,
                               vmem_budget_bytes=None):
    """x: (N, C_in, L_in) f32, weight: (C_in, C_out, K), bias: (C_out,) or None."""
    N, C_in, L_in = x.shape
    w_cin, C_out, K = weight.shape
    assert w_cin == C_in
    s = int(stride)
    p = int(padding)
    L_out = (L_in - 1) * s - 2 * p + K
    assert L_out > 0

    # ---- polyphase geometry (static python ints) ----
    kp = -(-K // s)                               # taps per phase
    m0 = [(c + p) // s for c in range(s)]         # per-residue-class input offset
    m0_min, m0_max = min(m0), max(m0)
    d_off = [m - m0_min for m in m0]
    kp_ext = kp + (m0_max - m0_min)               # taps of the fused common window
    halo = kp_ext - 1
    pad_l = (kp - 1) - m0_min                     # left shift of the padded input
    M_out = -(-L_out // s)                        # outputs per residue class
    R = s * C_out                                 # phase-major output rows

    # ---- tiling / VMEM budget (generation-derived) ----
    vmem_limit = _vmem_limit_bytes()
    budget = int(vmem_limit * 0.6) if vmem_budget_bytes is None else int(vmem_budget_bytes)
    two_piece, bn, nb, tm, n_m = _pick_tiling(N, C_in, C_out, s, kp_ext, M_out, budget)
    M_pad = n_m * tm
    L_q = (n_m + 1) * tm if two_piece else M_pad + halo

    # ---- operand prep (one cheap fused pad+cast; no NCL->NLC transpose, no
    #      zero-dilated activation ever hits HBM) ----
    x_q = _shift_window(x.astype(jnp.float32), pad_l, L_q).astype(jnp.bfloat16)

    scale = float(np.sqrt(2.0) / np.sqrt(C_in))
    w_sc = weight.astype(jnp.float32) * scale
    w_p = jnp.pad(w_sc, ((0, 0), (0, 0), (0, kp * s - K)))       # (C_in, C_out, kp*s)
    w_r = w_p.reshape(C_in, C_out, kp, s)                         # [i, o, j, r]
    w_t = jnp.flip(jnp.transpose(w_r, (3, 1, 2, 0)), axis=2)      # [r, o, j', i]
    phase_blocks = []
    for c in range(s):                                            # fuse phases on a
        wc = w_t[(c + p) % s]                                     # common window
        wc = jnp.pad(wc, ((0, 0), (d_off[c], kp_ext - kp - d_off[c]), (0, 0)))
        phase_blocks.append(wc)
    w_f = jnp.stack(phase_blocks, axis=0).reshape(R, kp_ext * C_in).astype(jnp.bfloat16)

    if bias is None:
        b_f = jnp.zeros((R, 1), jnp.float32)
    else:
        b_f = jnp.tile(bias.astype(jnp.float32).reshape(1, C_out), (s, 1)).reshape(R, 1)

    # ---- pallas_call ----
    kernel = _make_kernel(bn=bn, tm=tm, kp_ext=kp_ext, two_piece=two_piece)

    if two_piece:
        inputs = [x_q, x_q]
        x_specs = [pl.BlockSpec((1, C_in, tm), lambda b, m: (b, 0, m)),
                   pl.BlockSpec((1, C_in, tm), lambda b, m: (b, 0, m + 1))]
    else:
        inputs = [x_q]
        x_specs = [pl.BlockSpec((bn, C_in, L_q), lambda b, m: (b, 0, 0))]
    inputs += [w_f, b_f]
    in_specs = x_specs + [
        pl.BlockSpec((R, kp_ext * C_in), lambda b, m: (0, 0)),
        pl.BlockSpec((R, 1), lambda b, m: (0, 0)),
    ]

    out_pm = pl.pallas_call(
        kernel,
        out_shape=jax.ShapeDtypeStruct((N, R, M_pad), jnp.float32),
        grid=(nb, n_m),
        in_specs=in_specs,
        out_specs=pl.BlockSpec((bn, R, tm), lambda b, m: (b, 0, m)),
        compiler_params=pltpu.CompilerParams(
            dimension_semantics=("parallel", "parallel"),
            vmem_limit_bytes=vmem_limit),
    )(*inputs)

    # Phase-major (N, s*C_out, M_pad) -> NCL (N, C_out, L_out).
    # Single fused XLA transpose+reshape+crop (no in-kernel interleave matmul).
    out = out_pm.reshape(N, s, C_out, M_pad).transpose(0, 2, 3, 1)
    out = out.reshape(N, C_out, s * M_pad)
    return out[:, :, :L_out]


# --------------------------------------------------------------------------- #
# Reference + test
# --------------------------------------------------------------------------- #
def _reference(x, weight, bias, stride, padding):
    """Direct numpy implementation of F.conv_transpose1d(weight*scale) semantics."""
    x = np.asarray(x, np.float32)
    w = np.asarray(weight, np.float32) * (np.sqrt(2.0) / np.sqrt(x.shape[1]))
    N, C_in, L_in = x.shape
    _, C_out, K = w.shape
    L_out = (L_in - 1) * stride - 2 * padding + K
    out = np.zeros((N, C_out, L_out), np.float32)
    for l in range(L_in):
        for k in range(K):
            t = l * stride + k - padding
            if 0 <= t < L_out:
                out[:, :, t] += np.einsum('ni,io->no', x[:, :, l], w[:, :, k])
    if bias is not None:
        out = out + np.asarray(bias, np.float32)[None, :, None]
    return out


def _check(x, w, b, stride, padding, **kw):
    out = equalized_conv_transpose1d(x, w, b, stride=stride, padding=padding, **kw)
    out = jax.block_until_ready(out)
    ref = _reference(x, w, b, stride, padding)
    assert out.shape == ref.shape, (out.shape, ref.shape)
    # bf16 MXU operands with f32 accumulation -> bf16-level tolerance.
    np.testing.assert_allclose(np.asarray(out), ref, rtol=5e-2, atol=5e-2)


if __name__ == "__main__":
    key = jax.random.PRNGKey(0)
    kx, kw, kb, kx4, kw1 = jax.random.split(key, 5)

    # Config A: stride=2 upsampling path (single-tile mode, phase fusion).
    N, C_in, C_out, K = 2, 8, 16, 5
    L_in, stride, padding = 16, 2, 1
    x = jax.random.normal(kx, (N, C_in, L_in), dtype=jnp.float32)
    weight = jax.random.normal(kw, (C_in, C_out, K), dtype=jnp.float32)   # normal_ init
    bias = 0.1 * jax.random.normal(kb, (C_out,), dtype=jnp.float32)
    _check(x, weight, bias, stride, padding)

    # Config B: stride=1 path, batch folding (bn=2) across grid steps.
    x4 = jax.random.normal(kx4, (4, C_in, L_in), dtype=jnp.float32)
    w1 = jax.random.normal(kw1, (C_in, C_out, 3), dtype=jnp.float32)
    _check(x4, w1, bias, 1, 1)

    # Config C: force the halo-tiled (two adjacent x blocks per step) long-L path.
    _check(x, weight, bias, stride, padding, vmem_budget_bytes=0)

    print("KERNEL_OK")
</pallas_src>

<mosaic_0001>
module attributes {stable_mosaic.version = 11 : i64} {
  func.func @body(%arg0: i32, %arg1: i32, %arg2: memref<1x8x20xbf16, #tpu.memory_space<vmem>>, %arg3: memref<32x32xbf16, #tpu.memory_space<vmem>>, %arg4: memref<32x1xf32, #tpu.memory_space<vmem>>, %arg5: memref<1x32x17xf32, #tpu.memory_space<vmem>>) attributes {dimension_semantics = [#tpu.dimension_semantics<parallel>, #tpu.dimension_semantics<parallel>], iteration_bounds = array<i64: 2, 1>, scalar_prefetch = 0 : i64, scratch_operands = 0 : i64, tpu.core_type = #tpu.core_type<tc>, window_params = [{transform_indices = @transform_0, window_bounds = array<i64: 1, 8, 20>}, {pipeline_mode = #tpu.pipeline_mode<synchronous>, transform_indices = @transform_1, window_bounds = array<i64: 32, 32>}, {pipeline_mode = #tpu.pipeline_mode<synchronous>, transform_indices = @transform_2, window_bounds = array<i64: 32, 1>}, {transform_indices = @transform_3, window_bounds = array<i64: 1, 32, 17>}]} {
    %c0 = arith.constant 0 : index
    %c0_0 = arith.constant 0 : index
    %0 = vector.load %arg3[%c0, %c0_0] : memref<32x32xbf16, #tpu.memory_space<vmem>>, vector<32x32xbf16>
    %c0_1 = arith.constant 0 : index
    %c0_2 = arith.constant 0 : index
    %1 = vector.load %arg4[%c0_1, %c0_2] : memref<32x1xf32, #tpu.memory_space<vmem>>, vector<32x1xf32>
    %2 = vector.shape_cast %1 : vector<32x1xf32> to vector<32x1xf32>
    %3 = vector.broadcast %2 : vector<32x1xf32> to vector<32x17xf32>
    %c0_3 = arith.constant 0 : index
    %c0_4 = arith.constant 0 : index
    %c0_5 = arith.constant 0 : index
    %4 = vector.load %arg2[%c0_3, %c0_4, %c0_5] : memref<1x8x20xbf16, #tpu.memory_space<vmem>>, vector<1x8x20xbf16>
    %5 = vector.shape_cast %4 : vector<1x8x20xbf16> to vector<8x20xbf16>
    %6 = vector.extract_strided_slice %5 {offsets = [0, 0], sizes = [8, 17], strides = [1, 1]} : vector<8x20xbf16> to vector<8x17xbf16>
    %7 = vector.extract_strided_slice %5 {offsets = [0, 1], sizes = [8, 17], strides = [1, 1]} : vector<8x20xbf16> to vector<8x17xbf16>
    %8 = vector.extract_strided_slice %5 {offsets = [0, 2], sizes = [8, 17], strides = [1, 1]} : vector<8x20xbf16> to vector<8x17xbf16>
    %9 = vector.extract_strided_slice %5 {offsets = [0, 3], sizes = [8, 17], strides = [1, 1]} : vector<8x20xbf16> to vector<8x17xbf16>
    %10 = tpu.concatenate %6, %7, %8, %9 in 0 : vector<8x17xbf16>, vector<8x17xbf16>, vector<8x17xbf16>, vector<8x17xbf16> -> vector<32x17xbf16>
    %cst = arith.constant dense<0.000000e+00> : vector<32x17xf32>
    %11 = tpu.matmul %0, %10, %cst {dimension_numbers = #tpu.dot_dimension_numbers<[1], [0], [0], [1], [0, 0, 1, 1], [], []>} : vector<32x32xbf16>, vector<32x17xbf16>, vector<32x17xf32> -> vector<32x17xf32>
    %12 = arith.addf %11, %3 : vector<32x17xf32>
    %c0_6 = arith.constant 0 : index
    %c0_7 = arith.constant 0 : index
    %c0_8 = arith.constant 0 : index
    %13 = vector.load %arg5[%c0_6, %c0_7, %c0_8] : memref<1x32x17xf32, #tpu.memory_space<vmem>>, vector<1x32x17xf32>
    %14 = vector.shape_cast %13 : vector<1x32x17xf32> to vector<32x17xf32>
    %15 = vector.shape_cast %12 : vector<32x17xf32> to vector<1x32x17xf32>
    tpu.vector_store %arg5[%c0_6, %c0_7, %c0_8], %15 {strides = array<i32>} : memref<1x32x17xf32, #tpu.memory_space<vmem>>, vector<1x32x17xf32>,
    return
  }
  func.func @transform_0(%arg0: i32, %arg1: i32) -> (i32, i32, i32) {
    %c0_i32 = arith.constant 0 : i32
    %c0_i32_0 = arith.constant 0 : i32
    %c0_i32_1 = arith.constant 0 : i32
    return %arg0, %c0_i32, %c0_i32_0 : i32, i32, i32
  }
  func.func @transform_1(%arg0: i32, %arg1: i32) -> (i32, i32) {
    %c0_i32 = arith.constant 0 : i32
    %c0_i32_0 = arith.constant 0 : i32
    %c0_i32_1 = arith.constant 0 : i32
    return %c0_i32, %c0_i32_0 : i32, i32
  }
  func.func @transform_2(%arg0: i32, %arg1: i32) -> (i32, i32) {
    %c0_i32 = arith.constant 0 : i32
    %c0_i32_0 = arith.constant 0 : i32
    %c0_i32_1 = arith.constant 0 : i32
    return %c0_i32, %c0_i32_0 : i32, i32
  }
  func.func @transform_3(%arg0: i32, %arg1: i32) -> (i32, i32, i32) {
    %c0_i32 = arith.constant 0 : i32
    %c0_i32_0 = arith.constant 0 : i32
    return %arg0, %c0_i32, %arg1 : i32, i32, i32
  }
}

</mosaic_0001>

<llo_original>
// kernel: tpu_custom_call.1
$region0: #{tpu_custom_call.1}
  #allocation0 [shape = 'u32[]', space=smem, size = 0x4, offset = 0x4, fixed_abs, tag = 'smem constant byte address 0x4 - core index']
  #allocation1 [shape = 'u32[144,128]{1,0:T(1,128)}', space=vmem, size = 0x12000, scoped, tag = 'internal scratch']
  %s0 = inlined_call_operand.vmem [shape: bf16[2,8,20], index: 0, kind: input, shape index: {}]
  %s1 = inlined_call_operand.vmem [shape: bf16[32,32], index: 1, kind: input, shape index: {}]
  %s2 = inlined_call_operand.vmem [shape: f32[32,1], index: 2, kind: input, shape index: {}]
  %s3 = inlined_call_operand.vmem [shape: f32[2,32,17], index: 3, kind: output, shape index: {}]
  %s4 = sld [smem:[#allocation0]]
  $region45: #{tpu_custom_call.1} parent=0
    _
  %s6 = ssub.s32 1, %s4
  %s7 = scalar_select 0, %s6, %s4
  loop: start=0, step=1, limit=4
  $region2: #{tpu_custom_call.1} parent=0 // loop_pre_header
    _
  $region3: #{tpu_custom_call.1} parent=0 // loop_header
    %s9 = sphi 0, %s13
    %p10 = scmp.ge.s32.totalorder %s9, 4
    %s16 = sphi 0, %s28
    %s17 = sphi 0, %s24
    %s18 = sphi 0, %s16
    %s19 = sphi 0, %s17
    %s20 = sphi 0, %s18
    %s21 = sphi 0, %s19
    %s31 = sphi 0, %s33
    %s34 = sphi 0, %s31
    %s35 = sphi 0, %s34
    %s51 = sphi 0, %s35
    %s55 = sphi 0, %s55
    %s57 = sphi 0, %s55
    %s58 = sphi 0, %s57
    %s72 = sphi 0, %s58
    %s76 = sphi 0, %s76
    %s78 = sphi 0, %s76
    %s79 = sphi 0, %s78
    %s93 = sphi 0, %s79
    %s101 = sphi 0, %s103
    %s104 = sphi 0, %s101
    %s105 = sphi 0, %s104
    %s121 = sphi 0, %s105
  $region4: #{tpu_custom_call.1} parent=0 // loop_header_branch
    %12 = sbr.rel (%p10) target = $region8
  $region5: #{tpu_custom_call.1} parent=0 // loop_body
    %s14 = ssub.s32 %s9, 1
    %s15 = ssub.s32 %s9, 2
    %s22 = sadd.s32 1, %s17
    %p23 = scmp.ge.s32.totalorder %s22, 1
    %s24 = scalar_select %p23, 0, %s22
    %s25 = sadd.s32 1, %s16
    %s26 = scalar_select %p23, %s25, %s16
    %p27 = scmp.ge.s32.totalorder %s26, 2
    %s28 = scalar_select %p27, 0, %s26
    %s29 = ssub.s32 %s16, %s28
    %p30 = scmp.eq.s32.totalorder %s29, 0
    %s32 = sadd.s32 %s31, 1
    %s33 = scalar_select %p30, %s31, %s32
    %p36 = pneg %p30
    %p37 = scmp.eq.s32.totalorder %s9, 1
    %p38 = por %p36, %p37
    %p39 = scmp.ne.s32.totalorder %s31, %s34
    %p40 = scmp.eq.s32.totalorder %s9, 0
    %p41 = por %p39, %p40
    %p42 = scmp.ne.s32.totalorder %s31, %s34
    %p43 = scmp.eq.s32.totalorder %s14, 1
    %p44 = por %p42, %p43
    %p45 = scmp.ne.s32.totalorder %s34, %s35
    %p46 = scmp.eq.s32.totalorder %s14, 0
    %p47 = por %p45, %p46
    %p48 = scmp.ne.s32.totalorder %s34, %s35
    %p49 = scmp.eq.s32.totalorder %s15, 1
    %p50 = por %p48, %p49
    %p52 = scmp.ne.s32.totalorder %s35, %s51
    %p53 = scmp.eq.s32.totalorder %s15, 0
    %p54 = por %p52, %p53
    %s56 = sadd.s32 %s55, 1
    %p59 = scmp.eq.s32.totalorder %s9, 1
    %p60 = scmp.ne.s32.totalorder %s55, %s57
    %p61 = scmp.eq.s32.totalorder %s9, 0
    %p62 = por %p60, %p61
    %p63 = scmp.ne.s32.totalorder %s55, %s57
    %p64 = scmp.eq.s32.totalorder %s14, 1
    %p65 = por %p63, %p64
    %p66 = scmp.ne.s32.totalorder %s57, %s58
    %p67 = scmp.eq.s32.totalorder %s14, 0
    %p68 = por %p66, %p67
    %p69 = scmp.ne.s32.totalorder %s57, %s58
    %p70 = scmp.eq.s32.totalorder %s15, 1
    %p71 = por %p69, %p70
    %p73 = scmp.ne.s32.totalorder %s58, %s72
    %p74 = scmp.eq.s32.totalorder %s15, 0
    %p75 = por %p73, %p74
    %s77 = sadd.s32 %s76, 1
    %p80 = scmp.eq.s32.totalorder %s9, 1
    %p81 = scmp.ne.s32.totalorder %s76, %s78
    %p82 = scmp.eq.s32.totalorder %s9, 0
    %p83 = por %p81, %p82
    %p84 = scmp.ne.s32.totalorder %s76, %s78
    %p85 = scmp.eq.s32.totalorder %s14, 1
    %p86 = por %p84, %p85
    %p87 = scmp.ne.s32.totalorder %s78, %s79
    %p88 = scmp.eq.s32.totalorder %s14, 0
    %p89 = por %p87, %p88
    %p90 = scmp.ne.s32.totalorder %s78, %s79
    %p91 = scmp.eq.s32.totalorder %s15, 1
    %p92 = por %p90, %p91
    %p94 = scmp.ne.s32.totalorder %s79, %s93
    %p95 = scmp.eq.s32.totalorder %s15, 0
    %p96 = por %p94, %p95
    %s97 = ssub.s32 %s16, %s28
    %s98 = ssub.s32 %s17, %s24
    %s99 = sor.u32 %s97, %s98
    %p100 = scmp.eq.s32.totalorder %s99, 0
    %s102 = sadd.s32 %s101, 1
    %s103 = scalar_select %p100, %s101, %s102
    %p106 = pneg %p100
    %p107 = scmp.eq.s32.totalorder %s9, 1
    %p108 = por %p106, %p107
    %p109 = scmp.ne.s32.totalorder %s101, %s104
    %p110 = scmp.eq.s32.totalorder %s9, 0
    %p111 = por %p109, %p110
    %p112 = scmp.ne.s32.totalorder %s101, %s104
    %p113 = scmp.eq.s32.totalorder %s14, 1
    %p114 = por %p112, %p113
    %p115 = scmp.ne.s32.totalorder %s104, %s105
    %p116 = scmp.eq.s32.totalorder %s14, 0
    %p117 = por %p115, %p116
    %p118 = scmp.ne.s32.totalorder %s104, %s105
    %p119 = scmp.eq.s32.totalorder %s15, 1
    %p120 = por %p118, %p119
    %p122 = scmp.ne.s32.totalorder %s105, %s121
    %p123 = scmp.eq.s32.totalorder %s15, 0
    %p124 = por %p122, %p123
    %p125 = scmp.le.s32.totalorder 1, %s9
    %p126 = scmp.lt.s32.totalorder %s9, 3
    %p127 = pnand %p125, %p126
    %p128 = pneg %p127
    // Predicated region
    $region9: #{tpu_custom_call.1} parent=5 // pred_check
      _
    $region10: #{tpu_custom_call.1} parent=5 // pred_check_branch
      %130 = sbr.rel (%p127) target = $region12
    $region11: #{tpu_custom_call.1} parent=5 // pred_region
      %s131 = ssub.s32 %s9, 1
      // Predicated region
      $region13: #{tpu_custom_call.1} parent=11 // pred_check
        %p132 = pneg %p68
      $region14: #{tpu_custom_call.1} parent=11 // pred_check_branch
        %134 = sbr.rel (%p132) target = $region16
      $region15: #{tpu_custom_call.1} parent=11 // pred_region
        _
      $region16: #{tpu_custom_call.1} parent=11 // pred_fallthru
        _
      // Predicated region
      $region17: #{tpu_custom_call.1} parent=11 // pred_check
        %p135 = pneg %p89
      $region18: #{tpu_custom_call.1} parent=11 // pred_check_branch
        %137 = sbr.rel (%p135) target = $region20
      $region19: #{tpu_custom_call.1} parent=11 // pred_region
        _
      $region20: #{tpu_custom_call.1} parent=11 // pred_fallthru
        _
    $region12: #{tpu_custom_call.1} parent=5 // pred_fallthru
      _
    %p138 = scmp.lt.s32.totalorder %s9, 2
    // Predicated region
    $region21: #{tpu_custom_call.1} parent=5 // pred_check
      %p139 = pneg %p138
    $region22: #{tpu_custom_call.1} parent=5 // pred_check_branch
      %141 = sbr.rel (%p139) target = $region24
    $region23: #{tpu_custom_call.1} parent=5 // pred_region
      // Predicated region
      $region25: #{tpu_custom_call.1} parent=23 // pred_check
        %p142 = pneg %p41
      $region26: #{tpu_custom_call.1} parent=23 // pred_check_branch
        %144 = sbr.rel (%p142) target = $region28
      $region27: #{tpu_custom_call.1} parent=23 // pred_region
        %p145 = scmp.lt.s32.totalorder %s16, 1
        %s146 = scalar_select %p145, %s16, 1
        %s147 = smul.addr %s146, 4
        %s148 = scalar_lea.vmem %s0, %s147
      $region28: #{tpu_custom_call.1} parent=23 // pred_fallthru
        _
    $region24: #{tpu_custom_call.1} parent=5 // pred_fallthru
      _
    %p149 = scmp.le.s32.totalorder 1, %s9
    %p150 = scmp.lt.s32.totalorder %s9, 3
    %p151 = pnand %p149, %p150
    %p152 = pneg %p151
    // Predicated region
    $region29: #{tpu_custom_call.1} parent=5 // pred_check
      _
    $region30: #{tpu_custom_call.1} parent=5 // pred_check_branch
      %154 = sbr.rel (%p151) target = $region32
    $region31: #{tpu_custom_call.1} parent=5 // pred_region
      %s155 = ssub.s32 %s9, 1
      %p156 = scmp.lt.s32.totalorder %s18, 1
      %s157 = scalar_select %p156, %s18, 1
      %s158 = smul.addr %s157, 4
      %s159 = scalar_lea.vmem %s0, %s158
      %p160 = pneg %p47
      %p161 = pneg %p44
      %p162 = pneg %p68
      %p163 = pneg %p65
      %p164 = pneg %p89
      %p165 = pneg %p86
      %p166 = pneg %p117
      %p167 = pneg %p114
      %p168 = scmp.lt.s32.totalorder %s18, 1
      %s169 = scalar_select %p168, %s18, 1
      %p170 = scmp.lt.s32.totalorder %s19, 0
      %s171 = scalar_select %p170, %s19, 0
      %s172 = smul.addr %s169, 4
      %s173 = sadd.s32 %s171, %s172
      %s174 = smul.addr %s173, 8
      %s175 = scalar_lea.vmem %s3, %s174
      %p176 = scmp.lt.s32.totalorder %s18, 1
      %s177 = scalar_select %p176, %s18, 1
      %s178 = smul.addr %s177, 4
      %s179 = scalar_lea.vmem %s0, %s178
      %p180 = scmp.lt.s32.totalorder %s18, 1
      %s181 = scalar_select %p180, %s18, 1
      %p182 = scmp.lt.s32.totalorder %s19, 0
      %s183 = scalar_select %p182, %s19, 0
      %s184 = smul.addr %s181, 4
      %s185 = sadd.s32 %s183, %s184
      %s186 = smul.addr %s185, 8
      %s187 = scalar_lea.vmem %s3, %s186
      %v189 = vld [vmem:[%s1] sm:$0xf]
      %v190 = vld [vmem:[%s1 + $0x4] sm:$0xf]
      %v191 = vld [vmem:[%s1 + $0x8] sm:$0xf]
      %v192 = vld [vmem:[%s1 + $0xc] sm:$0xf]
      %v193 = vld [vmem:[%s2] sm:$0xff]
      %v194 = vld [vmem:[%s2 + $0x8] sm:$0xff]
      %v195 = vld [vmem:[%s2 + $0x10] sm:$0xff]
      %v196 = vld [vmem:[%s2 + $0x18] sm:$0xff]
      %198 = vset.pattern.permute.xlu0 0
      %199 = vperm.xlu0 %198, %v193
      %v200 = vpop.permute.xlu0 %199
      %203 = vset.pattern.permute.xlu0 0
      %204 = vperm.xlu0 %203, %v194
      %v205 = vpop.permute.xlu0 %204
      %208 = vset.pattern.permute.xlu0 0
      %209 = vperm.xlu0 %208, %v195
      %v210 = vpop.permute.xlu0 %209
      %213 = vset.pattern.permute.xlu0 0
      %214 = vperm.xlu0 %213, %v196
      %v215 = vpop.permute.xlu0 %214
      %v217 = vld [vmem:[%s179] sm:$0xf]
      %v219 = vunpack.c.l.b16 %v217
      %v220 = vpack.c.b16 %v219, %v219
      %221 = vrot.lane.b32.xlu0 %v220, 127
      %v222 = vpop.permute.xlu0 %221
      %223 = vrot.lane.b32.xlu0 %v220, 126
      %v224 = vpop.permute.xlu0 %223
      %225 = vrot.lane.b32.xlu0 %v220, 125
      %v226 = vpop.permute.xlu0 %225
      %vm227 = vcmask 1043456
      %v230 = vsel %vm227, %v217, %v222
      %v234 = vsel %vm227, %v224, %v226
      %v240 = vunpack.c.l.b16 %v189
      %v241 = vunpack.c.l.b16 %v190
      %v242 = vunpack.c.l.b16 %v191
      %v243 = vunpack.c.l.b16 %v192
      %v244 = vpack.c.b16 %v241, %v240
      %v245 = vpack.c.b16 %v243, %v242
      %vm246 = vcmask 261120
      %v248 = vsel %vm246, %v244, 0
      %v251 = vsel %vm246, %v245, 0
      %253 = vmatprep.subr.bf16.mxu0 0
      %254 = vmatpush1.bf16.msra.mxu0 0
      %255 = vmatprep.subr.bf16.mxu0 0
      %256 = vmatpush1.bf16.msra.mxu0 0
      %257 = vmatprep.subr.bf16.mxu0 0
      %258 = vmatpush1.bf16.msra.mxu0 0
      %259 = vmatprep.subr.bf16.mxu0 0
      %260 = vmatpush1.bf16.msra.mxu0 0
      %261 = vmatprep.subr.bf16.mxu0 0
      %262 = vmatpush1.bf16.msra.mxu0 0
      %263 = vmatprep.subr.bf16.mxu0 0
      %264 = vmatpush1.bf16.msra.mxu0 0
      %265 = vmatprep.subr.bf16.mxu0 0
      %266 = vmatpush1.bf16.msra.mxu0 %v234
      %267 = vmatprep.subr.bf16.mxu0 0
      %268 = vmatpush1.bf16.msra.mxu0 %v230
      %269 = vmatprep.subr.bf16.mxu0 0
      %270 = vmatpush2.bf16.msra.mxu0 0
      %271 = vmatprep.subr.bf16.mxu0 0
      %272 = vmatpush2.bf16.msra.mxu0 0
      %273 = vmatprep.subr.bf16.mxu0 0
      %274 = vmatpush2.bf16.msra.mxu0 0
      %275 = vmatprep.subr.bf16.mxu0 0
      %276 = vmatpush2.bf16.msra.mxu0 0
      %277 = vmatprep.subr.bf16.mxu0 0
      %278 = vmatpush2.bf16.msra.mxu0 0
      %279 = vmatprep.subr.bf16.mxu0 0
      %280 = vmatpush2.bf16.msra.mxu0 0
      %281 = vmatprep.subr.bf16.mxu0 0
      %282 = vmatpush2.bf16.msra.mxu0 0
      %283 = vmatprep.subr.bf16.mxu0 0
      %284 = vmatpush2.bf16.msra.mxu0 0
      %285 = vmatprep.mubr.bf16.mxu0 0
      %286 = vmatmul.mubr.bf16.gmra.mxu0 %v248
      %v287 = vpop.f32.mrf.mxu0
      %v288 = vadd.f32 %v200, %v287
      %v289 = vpop.f32.mrf.mxu0
      %v290 = vpop.f32.mrf.mxu0
      %v291 = vadd.f32 %v205, %v290
      %v292 = vpop.f32.mrf.mxu0
      %293 = vmatprep.mubr.bf16.mxu0 0
      %294 = vmatmul.mubr.bf16.gmra.mxu0 %v251
      %v295 = vpop.f32.mrf.mxu0
      %v296 = vadd.f32 %v210, %v295
      %v297 = vpop.f32.mrf.mxu0
      %v298 = vpop.f32.mrf.mxu0
      %v299 = vadd.f32 %v215, %v298
      %v300 = vpop.f32.mrf.mxu0
      %301 = vdwg.mxu0
      %vm302 = vcmask 138240
      %303 = vst.msk [vmem:[%s187] sm:$0xff] %vm302, %v288
      %304 = vst.msk [vmem:[%s187 + $0x8] sm:$0xff] %vm302, %v291
      %305 = vst.msk [vmem:[%s187 + $0x10] sm:$0xff] %vm302, %v296
      %306 = vst.msk [vmem:[%s187 + $0x18] sm:$0xff] %vm302, %v299
      %p307 = scmp.lt.s32.totalorder %s18, 1
      %s308 = scalar_select %p307, %s18, 1
      %p309 = scmp.lt.s32.totalorder %s19, 0
      %s310 = scalar_select %p309, %s19, 0
      %s311 = smul.addr %s308, 4
      %s312 = sadd.s32 %s310, %s311
      %s313 = smul.addr %s312, 8
      %s314 = scalar_lea.vmem %s3, %s313
      // Predicated region
      $region33: #{tpu_custom_call.1} parent=31 // pred_check
        %p315 = pneg %p114
      $region34: #{tpu_custom_call.1} parent=31 // pred_check_branch
        %317 = sbr.rel (%p315) target = $region36
      $region35: #{tpu_custom_call.1} parent=31 // pred_region
        _
      $region36: #{tpu_custom_call.1} parent=31 // pred_fallthru
        _
    $region32: #{tpu_custom_call.1} parent=5 // pred_fallthru
      _
    %p318 = scmp.le.s32.totalorder 2, %s9
    // Predicated region
    $region37: #{tpu_custom_call.1} parent=5 // pred_check
      %p319 = pneg %p318
    $region38: #{tpu_custom_call.1} parent=5 // pred_check_branch
      %321 = sbr.rel (%p319) target = $region40
    $region39: #{tpu_custom_call.1} parent=5 // pred_region
      %s322 = ssub.s32 %s9, 2
      // Predicated region
      $region41: #{tpu_custom_call.1} parent=39 // pred_check
        %p323 = pneg %p120
      $region42: #{tpu_custom_call.1} parent=39 // pred_check_branch
        %325 = sbr.rel (%p323) target = $region44
      $region43: #{tpu_custom_call.1} parent=39 // pred_region
        %p326 = scmp.lt.s32.totalorder %s20, 1
        %s327 = scalar_select %p326, %s20, 1
        %p328 = scmp.lt.s32.totalorder %s21, 0
        %s329 = scalar_select %p328, %s21, 0
        %s330 = smul.addr %s327, 4
        %s331 = sadd.s32 %s329, %s330
        %s332 = smul.addr %s331, 8
        %s333 = scalar_lea.vmem %s3, %s332
      $region44: #{tpu_custom_call.1} parent=39 // pred_fallthru
        _
    $region40: #{tpu_custom_call.1} parent=5 // pred_fallthru
      _
  $region6: #{tpu_custom_call.1} parent=0 // loop_footer
    %s13 = sadd.s32 1, %s9
  $region7: #{tpu_custom_call.1} parent=0 // loop_footer_branch
    %8 = sbr.rel target = $region3
  $region8: #{tpu_custom_call.1} parent=0 // loop_exit
    _

</llo_original>
